<compile_context>
chip_gen: v5e
topology: v5e:2x2
jax: 0.10.0
libtpu: 0.0.40
codegen_flags: <defaults>
</compile_context>

<pallas_src>
import math

import jax
import jax.numpy as jnp
from jax.experimental import pallas as pl
from jax.experimental.pallas import tpu as pltpu


# --------------------------- chip-dependent tuning ---------------------------
def _detect_tuning():
    """(tile_bytes, vmem_limit_bytes) — conservative defaults if detection fails."""
    try:
        kind = jax.devices()[0].device_kind.lower()
    except Exception:
        kind = ""
    if "v7" in kind:
        # v7x: 2 TCs, 64 MiB VMEM/TC, 3.2 TB/s HBM -> bigger tile, 48 MiB scoped.
        return 8 << 20, 48 << 20
    # v5e / v6e (and fallback): 4 MiB tile already sits at ~85% of HBM roofline;
    # 40 MiB scoped limit clears the ~16-17 MiB double-buffered footprint
    # (v5e's default scoped limit is only 16 MiB).
    return 4 << 20, 40 << 20


_TILE_BYTES, _VMEM_LIMIT = _detect_tuning()
_LANE = 128
_SPLIT_MIN_BYTES = 2 << 20   # only force a 2-way split for reasonably large tensors


def _round_up(x, m):
    return ((x + m - 1) // m) * m


# --------------------------------- kernels ----------------------------------
def _tlu_rows_kernel(x_ref, ab_ref, o_ref):
    """Per-row alpha/beta: x (tr, tc), ab (tr, 2) -> lane-broadcast."""
    x = x_ref[...]
    ab = ab_ref[...]
    a = ab[:, 0:1]
    b = ab[:, 1:2]
    o_ref[...] = x * jnp.where(x >= 0, b, a)


def _tlu_cols_kernel(x_ref, ab_ref, o_ref):
    """Per-column alpha/beta: x (tr, tc), ab (2, tc) -> sublane-broadcast."""
    x = x_ref[...]
    ab = ab_ref[...]
    a = ab[0:1, :]
    b = ab[1:2, :]
    o_ref[...] = x * jnp.where(x >= 0, b, a)


# --------------------------------- wrapper -----------------------------------
def tlu(x, alpha, beta):
    """TLU forward.  x: (N, C, *spatial) -> same shape/dtype as x."""
    if x.ndim < 2:
        raise ValueError("TLU expects input of shape (N, C, *spatial)")
    N, C = x.shape[0], x.shape[1]
    S = int(math.prod(x.shape[2:]))          # 1 if no spatial dims
    dtype = x.dtype
    itemsize = jnp.dtype(dtype).itemsize
    row_pack = max(8, 8 * (4 // itemsize))   # f32: 8, bf16: 16, int8: 32

    alpha = alpha.astype(dtype)
    beta = beta.astype(dtype)

    if S >= _LANE:
        # Case A: lane axis = flattened spatial extent; scales vary per row.
        rows, cols = N * C, S
        x2 = x.reshape(rows, cols)                                   # free view
        ab = jnp.stack([jnp.tile(alpha, N), jnp.tile(beta, N)], axis=1)  # (rows, 2)
        kernel = _tlu_rows_kernel
        ab_block = lambda tr, tc: ((tr, 2), lambda i, j: (i, 0))
    else:
        # Case B: small/absent spatial extent -> fold channels into the lane
        # axis so stores stay lane-dense; scales vary per column.
        rows, cols = N, C * S
        x2 = x.reshape(rows, cols)                                   # free view
        ab = jnp.stack([jnp.repeat(alpha, S), jnp.repeat(beta, S)], axis=0)  # (2, cols)
        kernel = _tlu_cols_kernel
        ab_block = lambda tr, tc: ((2, tc), lambda i, j: (0, j))

    # ---- dtype-aware tile selection (~_TILE_BYTES per step) ----
    max_tc = max(_LANE, (_TILE_BYTES // (row_pack * itemsize)) // _LANE * _LANE)
    tc = cols if cols <= max_tc else max_tc
    max_tr = max(row_pack, (_TILE_BYTES // (max(tc, 1) * itemsize)) // row_pack * row_pack)
    tr = rows if rows <= max_tr else max_tr

    # ---- guarantee >= 2 blocks on a "parallel" axis for v7x's 2 TensorCores ----
    total_bytes = rows * cols * itemsize
    if (total_bytes >= _SPLIT_MIN_BYTES
            and pl.cdiv(rows, tr) == 1 and pl.cdiv(cols, tc) == 1):
        if rows >= 2 * row_pack:
            tr = _round_up(pl.cdiv(rows, 2), row_pack)
        elif cols >= 2 * _LANE:
            tc = _round_up(pl.cdiv(cols, 2), _LANE)

    # Columns are the INNERMOST grid axis: the (tr,2)/(2,tc) alpha-beta block then
    # keeps its block index across the inner loop and is not re-fetched. Do not
    # reorder the grid.
    grid = (pl.cdiv(rows, tr), pl.cdiv(cols, tc))
    ab_shape, ab_map = ab_block(tr, tc)

    out2 = pl.pallas_call(
        kernel,
        out_shape=jax.ShapeDtypeStruct((rows, cols), dtype),
        grid_spec=pltpu.PrefetchScalarGridSpec(
            num_scalar_prefetch=0,
            grid=grid,
            in_specs=[
                pl.BlockSpec((tr, tc), lambda i, j: (i, j)),
                pl.BlockSpec(ab_shape, ab_map),
            ],
            out_specs=pl.BlockSpec((tr, tc), lambda i, j: (i, j)),
        ),
        compiler_params=pltpu.CompilerParams(
            dimension_semantics=("parallel", "parallel"),
            vmem_limit_bytes=_VMEM_LIMIT),
    )(x2, ab)

    return out2.reshape(x.shape)


# ---------------------------- pure-JAX reference ----------------------------
def _ref_tlu(x, alpha, beta):
    nd = x.ndim - 2
    shape = (1, -1) + (1,) * nd
    a = alpha.astype(x.dtype).reshape(shape)
    b = beta.astype(x.dtype).reshape(shape)
    return jnp.where(x >= 0, b * x, a * x)


if __name__ == "__main__":
    key = jax.random.PRNGKey(0)
    kx, ka, kb, kx3, kx4, kx5 = jax.random.split(key, 6)

    tlu_jit = jax.jit(tlu)

    # --- Case A (lane-dense spatial): (N, C, H, W) = (2, 4, 16, 16), S=256 ---
    N, C, H, W = 2, 4, 16, 16
    x = jax.random.normal(kx, (N, C, H, W), jnp.float32)
    alpha = jax.random.normal(ka, (C,), jnp.float32)   # non-default so the
    beta = jax.random.normal(kb, (C,), jnp.float32)    # per-channel path is exercised
    out = jax.block_until_ready(tlu_jit(x, alpha, beta))
    assert out.shape == x.shape and out.dtype == x.dtype
    assert jnp.allclose(out, _ref_tlu(x, alpha, beta), atol=1e-6, rtol=1e-6), "4-D mismatch"

    # --- Case A, 3-D spatial: (2, 4, 8, 8, 8), S=512 ---
    x3 = jax.random.normal(kx3, (2, 4, 8, 8, 8), jnp.float32)
    out3 = jax.block_until_ready(tlu_jit(x3, alpha, beta))
    assert jnp.allclose(out3, _ref_tlu(x3, alpha, beta), atol=1e-6, rtol=1e-6), "5-D mismatch"

    # --- Case B (small spatial, S=49 < 128): (2, 8, 7, 7) ---
    C2 = 8
    x4 = jax.random.normal(kx4, (2, C2, 7, 7), jnp.float32)
    a2 = jax.random.normal(ka, (C2,), jnp.float32)
    b2 = jax.random.normal(kb, (C2,), jnp.float32)
    out4 = jax.block_until_ready(tlu_jit(x4, a2, b2))
    assert jnp.allclose(out4, _ref_tlu(x4, a2, b2), atol=1e-6, rtol=1e-6), "7x7 mismatch"

    # --- Case B (no spatial dims at all): (N, C) = (2, 4) ---
    x5 = jax.random.normal(kx5, (2, C), jnp.float32)
    out5 = jax.block_until_ready(tlu_jit(x5, alpha, beta))
    assert jnp.allclose(out5, _ref_tlu(x5, alpha, beta), atol=1e-6, rtol=1e-6), "2-D mismatch"

    # --- bf16 path (dtype-aware tiling + same-dtype math) ---
    xb = x.astype(jnp.bfloat16)
    ab_ = alpha.astype(jnp.bfloat16)
    bb_ = beta.astype(jnp.bfloat16)
    outb = jax.block_until_ready(tlu_jit(xb, ab_, bb_))
    assert outb.dtype == jnp.bfloat16
    assert jnp.allclose(outb.astype(jnp.float32),
                        _ref_tlu(xb, ab_, bb_).astype(jnp.float32),
                        atol=1e-2, rtol=1e-2), "bf16 mismatch"

    # --- Default-init sanity: alpha=0, beta=1  ->  ReLU ---
    a0 = jnp.zeros((C,), jnp.float32)
    b1 = jnp.ones((C,), jnp.float32)
    out_def = jax.block_until_ready(tlu_jit(x, a0, b1))
    assert jnp.allclose(out_def, jnp.where(x >= 0, x, 0.0), atol=1e-6, rtol=1e-6)

    print("KERNEL_OK")
</pallas_src>

<mosaic_0001>
module attributes {stable_mosaic.version = 11 : i64} {
  func.func @_tlu_rows_kernel(%arg0: i32, %arg1: i32, %arg2: memref<8x256xf32, #tpu.memory_space<vmem>>, %arg3: memref<8x2xf32, #tpu.memory_space<vmem>>, %arg4: memref<8x256xf32, #tpu.memory_space<vmem>>) attributes {dimension_semantics = [#tpu.dimension_semantics<parallel>, #tpu.dimension_semantics<parallel>], iteration_bounds = array<i64: 1, 1>, scalar_prefetch = 0 : i64, scratch_operands = 0 : i64, tpu.core_type = #tpu.core_type<tc>, window_params = [{transform_indices = @transform_0, window_bounds = array<i64: 8, 256>}, {transform_indices = @transform_1, window_bounds = array<i64: 8, 2>}, {transform_indices = @transform_2, window_bounds = array<i64: 8, 256>}]} {
    %c0 = arith.constant 0 : index
    %c0_0 = arith.constant 0 : index
    %0 = vector.load %arg2[%c0, %c0_0] : memref<8x256xf32, #tpu.memory_space<vmem>>, vector<8x256xf32>
    %c0_1 = arith.constant 0 : index
    %c0_2 = arith.constant 0 : index
    %1 = vector.load %arg3[%c0_1, %c0_2] : memref<8x2xf32, #tpu.memory_space<vmem>>, vector<8x2xf32>
    %2 = vector.extract_strided_slice %1 {offsets = [0, 0], sizes = [8, 1], strides = [1, 1]} : vector<8x2xf32> to vector<8x1xf32>
    %3 = vector.extract_strided_slice %1 {offsets = [0, 1], sizes = [8, 1], strides = [1, 1]} : vector<8x2xf32> to vector<8x1xf32>
    %cst = arith.constant 0.000000e+00 : f32
    %4 = vector.broadcast %cst : f32 to vector<8x256xf32>
    %5 = arith.cmpf oge, %0, %4 : vector<8x256xf32>
    %6 = vector.shape_cast %3 : vector<8x1xf32> to vector<8x1xf32>
    %7 = vector.broadcast %6 : vector<8x1xf32> to vector<8x256xf32>
    %8 = vector.shape_cast %2 : vector<8x1xf32> to vector<8x1xf32>
    %9 = vector.broadcast %8 : vector<8x1xf32> to vector<8x256xf32>
    %10 = arith.select %5, %7, %9 : vector<8x256xi1>, vector<8x256xf32>
    %11 = arith.mulf %0, %10 : vector<8x256xf32>
    %c0_3 = arith.constant 0 : index
    %c0_4 = arith.constant 0 : index
    %12 = vector.load %arg4[%c0_3, %c0_4] : memref<8x256xf32, #tpu.memory_space<vmem>>, vector<8x256xf32>
    tpu.vector_store %arg4[%c0_3, %c0_4], %11 {strides = array<i32>} : memref<8x256xf32, #tpu.memory_space<vmem>>, vector<8x256xf32>,
    return
  }
  func.func @transform_0(%arg0: i32, %arg1: i32) -> (i32, i32) {
    %c0_i32 = arith.constant 0 : i32
    return %arg0, %arg1 : i32, i32
  }
  func.func @transform_1(%arg0: i32, %arg1: i32) -> (i32, i32) {
    %c0_i32 = arith.constant 0 : i32
    %c0_i32_0 = arith.constant 0 : i32
    return %arg0, %c0_i32 : i32, i32
  }
  func.func @transform_2(%arg0: i32, %arg1: i32) -> (i32, i32) {
    %c0_i32 = arith.constant 0 : i32
    return %arg0, %arg1 : i32, i32
  }
}

</mosaic_0001>

<llo_original>
// kernel: tile.17
$region0: #{tile.17}
  #allocation0 [shape = 's32[1]{0}', space=sflag, size = 0x4, scoped, tag = 'scoped memory for tile.17']
  %s0 = inlined_call_operand.vmem [shape: f32[4], index: 0, kind: input, shape index: {}]
  %s1 = inlined_call_operand.vmem [shape: f32[2,4], index: 1, kind: output, shape index: {}]
  // Predicated region
  $region2: #{tile.17} parent=0 // pred_check
    _
  $region3: #{tile.17} parent=0 // pred_check_branch
    %3 = sbr.rel (0) target = $region5
  $region4: #{tile.17} parent=0 // pred_region
    _
  $region5: #{tile.17} parent=0 // pred_fallthru
    _
  %v4 = vld [vmem:[%s0] ss:$0 sm:$0xff]
  %5 = vst [vmem:[%s1] sm:$0x3] %v4

// kernel: tile.18
$region0: #{tile.18}
  %s0 = inlined_call_operand.vmem [shape: f32[2,4], index: 0, kind: input, shape index: {}]
  %s1 = inlined_call_operand.vmem [shape: f32[8,1], index: 1, kind: output, shape index: {}]
  $region1: #{tile.18} parent=0
    #allocation0 [shape = 'u8[4096]{0}', space=vmem, size = 0x1000, scoped, tag = 'scoped mem for output reshape']
    #allocation1 [shape = 'u8[4096]{0}', space=vmem, size = 0x1000, scoped, tag = 'scoped mem for input reshape']
    %s3 = ssub.s32 4, 1
    %v4 = vld [vmem:[%s0] sm:%s3]
    %5 = vst [vmem:[#allocation1] sm:%s3] %v4
    %v6 = vld [vmem:[#allocation1] sm:$0x1]
    %vm7 = vcmask 31744
    %8 = vst.msk [vmem:[#allocation0] sm:$0x1] %vm7, %v6
    %s9 = scalar_lea.vmem [#allocation1], 1
    %v10 = vld [vmem:[%s9] sm:$0x1]
    %11 = vrot.lane.b32.xlu0 %v10, 4
    %v12 = vpop.permute.xlu0 %11
    %vm13 = vcmask 64544
    %14 = vst.msk [vmem:[#allocation0] sm:$0x1] %vm13, %v12
    %s16 = ssub.s32 2, 1
    %v17 = vld [vmem:[#allocation0] sm:%s16]
    %s19 = ssub.s32 2, 1
    %20 = vst [vmem:[%s1] sm:%s19] %v17

// kernel: tile.13
$region0: #{tile.13}
  #allocation2 [shape = 's32[1]{0}', space=sflag, size = 0x4, scoped, tag = 'scoped memory for tile.13']
  %s0 = inlined_call_operand.hbm [shape: f32[4], index: 0, kind: input, shape index: {}]
  %s1 = inlined_call_operand.vmem [shape: f32[2,4], index: 1, kind: output, shape index: {}]
  $region1: #{tile.13} parent=0
    #allocation0 [shape = 'u8[512]{0}', space=vmem, size = 0x400, scoped, tag = 'operand span for operand 0']
    #allocation1 [shape = 's32[1]{0}', space=sflag, size = 0x4, scoped, tag = 'scoped memory for tile.13']
    %2 = vsyncpa [#allocation1], 0
    // Predicated region
    $region2: #{tile.13} parent=1 // pred_check
      _
    $region3: #{tile.13} parent=1 // pred_check_branch
      %4 = sbr.rel (0) target = $region5
    $region4: #{tile.13} parent=1 // pred_region
      %6 = vsyncadd [#allocation1], 0
      %s8 = sshll.u32 %s0, 4
      %s9 = int_to_ptr.hbm [resolvable:$true] %s8
      %s10 = sshll.u32 [#allocation0], 4
      %s11 = int_to_ptr.vmem [resolvable:$true] %s10
      %13 = dma.hbm_to_vmem [thread:$0]  %s9, 16, %s11, [#allocation1]
    $region5: #{tile.13} parent=1 // pred_fallthru
      _
    // Predicated region
    $region6: #{tile.13} parent=1 // pred_check
      _
    $region7: #{tile.13} parent=1 // pred_check_branch
      %15 = sbr.rel (0) target = $region9
    $region8: #{tile.13} parent=1 // pred_region
      %17 = dma.done [#allocation1], 16
    $region9: #{tile.13} parent=1 // pred_fallthru
      _
    %v18 = vld [vmem:[#allocation0] ss:$0 sm:$0xff]
    %19 = vst [vmem:[%s1] sm:$0x3] %v18
    %20 = vsyncpa [#allocation1], 1

// kernel: tlu.1
$region0: #{tlu.1}
  #allocation0 [shape = 'u32[]', space=smem, size = 0x4, offset = 0x4, fixed_abs, tag = 'smem constant byte address 0x4 - core index']
  #allocation1 [shape = 'u32[72,128]{1,0:T(1,128)}', space=vmem, size = 0x9000, scoped, tag = 'internal scratch']
  %s0 = inlined_call_operand.vmem [shape: f32[8,256], index: 0, kind: input, shape index: {}]
  %s1 = inlined_call_operand.vmem [shape: f32[8,2], index: 1, kind: input, shape index: {}]
  %s2 = inlined_call_operand.vmem [shape: f32[8,256], index: 2, kind: output, shape index: {}]
  %s3 = sld [smem:[#allocation0]]
  $region18: #{tlu.1} parent=0
    _
  %s5 = ssub.s32 1, %s3
  %s6 = scalar_select 0, %s5, %s3
  // Predicated region
  $region2: #{tlu.1} parent=0 // pred_check
    _
  $region3: #{tlu.1} parent=0 // pred_check_branch
    %8 = sbr.rel (0) target = $region5
  $region4: #{tlu.1} parent=0 // pred_region
    _
  $region5: #{tlu.1} parent=0 // pred_fallthru
    _
  // Predicated region
  $region6: #{tlu.1} parent=0 // pred_check
    _
  $region7: #{tlu.1} parent=0 // pred_check_branch
    %10 = sbr.rel (0) target = $region9
  $region8: #{tlu.1} parent=0 // pred_region
    _
  $region9: #{tlu.1} parent=0 // pred_fallthru
    _
  %v11 = vld [vmem:[%s0] sm:$0xff]
  %v12 = vld [vmem:[%s0 + $0x8] sm:$0xff]
  %v13 = vld [vmem:[%s1] sm:$0xff]
  %vm14 = vcmp.ge.f32.partialorder %v11, 0.0
  %vm15 = vcmp.ge.f32.partialorder %v12, 0.0
  %17 = vset.pattern.permute.xlu0 1
  %18 = vperm.xlu0 %17, %v13
  %v19 = vpop.permute.xlu0 %18
  %21 = vset.pattern.permute.xlu0 0
  %22 = vperm.xlu0 %21, %v13
  %v23 = vpop.permute.xlu0 %22
  %v25 = vsel %vm14, %v19, %v23
  %v26 = vsel %vm15, %v19, %v23
  %v27 = vmul.f32 %v11, %v25
  %v28 = vmul.f32 %v12, %v26
  %29 = vst [vmem:[%s2] sm:$0xff] %v27
  %30 = vst [vmem:[%s2 + $0x8] sm:$0xff] %v28
  // Predicated region
  $region10: #{tlu.1} parent=0 // pred_check
    _
  $region11: #{tlu.1} parent=0 // pred_check_branch
    %32 = sbr.rel (0) target = $region13
  $region12: #{tlu.1} parent=0 // pred_region
    _
  $region13: #{tlu.1} parent=0 // pred_fallthru
    _
  // Predicated region
  $region14: #{tlu.1} parent=0 // pred_check
    _
  $region15: #{tlu.1} parent=0 // pred_check_branch
    %34 = sbr.rel (0) target = $region17
  $region16: #{tlu.1} parent=0 // pred_region
    _
  $region17: #{tlu.1} parent=0 // pred_fallthru
    _

</llo_original>
